<compile_context>
chip_gen: v6e
topology: v6e:2x2x1
jax: 0.10.0
libtpu: 0.0.40
codegen_flags: <defaults>
</compile_context>

<pallas_src>
import jax
import jax.numpy as jnp
from jax.experimental import pallas as pl
from jax.experimental.pallas import tpu as pltpu


L_PAD = 128   # lane-dense classifier output width (logits live in the first L lanes)


# -----------------------------------------------------------------------------
# Pallas kernel: BERT pooler (dense + tanh on the CLS hidden state) -> dropout
# (identity, inference) -> classifier Linear.  All matmuls are batched over the
# whole (tb, H) sublane tile.
# -----------------------------------------------------------------------------
def _pooler_classifier_kernel(cls_ref, wp_ref, bp_ref, wc_ref, bc_ref, out_ref):
    # cls_ref : (tb, H)     f32   CLS-token hidden states for this batch tile
    # wp_ref  : (H, H)      bf16  pooler dense weight, laid out (in, out)
    # bp_ref  : (1, H)      f32   pooler dense bias
    # wc_ref  : (H, L_PAD)  bf16  classifier weight, zero-padded to 128 lanes
    # bc_ref  : (1, L_PAD)  f32   classifier bias, zero-padded
    # out_ref : (tb, L_PAD) f32   lane-dense logits slab
    x = cls_ref[...].astype(jnp.bfloat16)                              # (tb, H)

    pooled = jnp.tanh(
        jnp.dot(x, wp_ref[...], preferred_element_type=jnp.float32) + bp_ref[...])

    # TODO(synk): nn.Dropout(0.1) is the identity at inference; training-mode dropout
    # would use pltpu.prng_seed + pltpu.prng_random_bits here.

    logits = jnp.dot(pooled.astype(jnp.bfloat16), wc_ref[...],
                     preferred_element_type=jnp.float32) + bc_ref[...]
    out_ref[...] = logits


# -----------------------------------------------------------------------------
# Weight repacking (PyTorch (out, in) Linear layout -> kernel layout)
# -----------------------------------------------------------------------------
def pack_for_kernel(pooler_w, pooler_b, cls_w, cls_b):
    H = pooler_w.shape[0]
    L = cls_w.shape[0]
    wp_k = pooler_w.T.astype(jnp.bfloat16)                              # (H, H)
    bp_k = pooler_b[None, :].astype(jnp.float32)                        # (1, H)
    wc_k = jnp.zeros((H, L_PAD), jnp.float32).at[:, :L].set(cls_w.T)    # (H, 128)
    wc_k = wc_k.astype(jnp.bfloat16)
    bc_k = jnp.zeros((1, L_PAD), jnp.float32).at[0, :L].set(cls_b)      # (1, 128)
    return wp_k, bp_k, wc_k, bc_k


# -----------------------------------------------------------------------------
# Wrapper: pad the batch to the 8-sublane granularity, run the kernel on a
# "parallel" batch grid axis, slice the lane-dense output back to (B, L).
# -----------------------------------------------------------------------------
def basic_bert_forward(last_hidden, pooler_w, pooler_b, cls_w, cls_b, *, tb=8):
    B, S, H = last_hidden.shape
    L = cls_w.shape[0]
    wp_k, bp_k, wc_k, bc_k = pack_for_kernel(pooler_w, pooler_b, cls_w, cls_b)

    cls_tok = last_hidden[:, 0, :]                                      # (B, H) CLS rows
    Bp = ((B + tb - 1) // tb) * tb
    cls_pad = jnp.pad(cls_tok, ((0, Bp - B), (0, 0)))                   # (Bp, H)

    out = pl.pallas_call(
        _pooler_classifier_kernel,
        out_shape=jax.ShapeDtypeStruct((Bp, L_PAD), jnp.float32),
        grid_spec=pltpu.PrefetchScalarGridSpec(
            num_scalar_prefetch=0,
            grid=(Bp // tb,),
            in_specs=[
                pl.BlockSpec((tb, H), lambda i: (i, 0)),        # per-tile CLS rows
                pl.BlockSpec((H, H), lambda i: (0, 0)),         # pooler W (resident)
                pl.BlockSpec((1, H), lambda i: (0, 0)),         # pooler b
                pl.BlockSpec((H, L_PAD), lambda i: (0, 0)),     # classifier W
                pl.BlockSpec((1, L_PAD), lambda i: (0, 0)),     # classifier b
            ],
            out_specs=pl.BlockSpec((tb, L_PAD), lambda i: (i, 0)),
        ),
        compiler_params=pltpu.CompilerParams(dimension_semantics=("parallel",)),
    )(cls_pad, wp_k, bp_k, wc_k, bc_k)

    return out[:B, :L]


# -----------------------------------------------------------------------------
# Independent plain-JAX reference (f32 throughout), mirrors the PyTorch ops.
# -----------------------------------------------------------------------------
def reference_forward(last_hidden, pooler_w, pooler_b, cls_w, cls_b):
    cls_tok = last_hidden[:, 0, :]                                      # (B, H)
    pooled = jnp.tanh(cls_tok @ pooler_w.T + pooler_b)                  # BERT pooler
    # dropout: identity at inference
    return pooled @ cls_w.T + cls_b                                     # classifier


if __name__ == "__main__":
    B, S, H = 2, 16, 32     # batch, seq_len, bert hidden_size (small)
    L = 3                   # num_labels (module default)
    VOCAB = 50

    key = jax.random.PRNGKey(0)
    k_emb, k_ids, kp1, kp2, kp3, kp4 = jax.random.split(key, 6)

    # TODO(synk): the frozen pretrained BERT encoder (self.embed, no_grad) is replaced
    # by a deterministic embedding-table lookup producing its last_hidden_state.
    emb_table = jax.random.normal(k_emb, (VOCAB, H), jnp.float32)
    input_ids = jax.random.randint(k_ids, (B, S), 0, VOCAB)
    attention_mask = jnp.ones((B, S), jnp.int32)     # unused by the stub embed
    token_type_ids = jnp.zeros((B, S), jnp.int32)    # unused by the stub embed
    last_hidden = emb_table[input_ids]               # (B, S, H) "last_hidden_state"

    # Pooler + classifier parameters (PyTorch Linear layout: (out, in) weights).
    pooler_w = 0.05 * jax.random.normal(kp1, (H, H), jnp.float32)
    pooler_b = 0.05 * jax.random.normal(kp2, (H,), jnp.float32)
    cls_w = 0.05 * jax.random.normal(kp3, (L, H), jnp.float32)
    cls_b = 0.05 * jax.random.normal(kp4, (L,), jnp.float32)

    logits = basic_bert_forward(last_hidden, pooler_w, pooler_b, cls_w, cls_b)
    logits = jax.block_until_ready(logits)

    ref = reference_forward(last_hidden, pooler_w, pooler_b, cls_w, cls_b)
    assert logits.shape == (B, L)
    # bf16 matmul operands + f32 accumulation -> loose-but-tight-enough tolerance
    assert jnp.allclose(logits, ref, atol=3e-2, rtol=3e-2), (logits, ref)
    print("KERNEL_OK")
</pallas_src>

<mosaic_0001>
module attributes {stable_mosaic.version = 11 : i64} {
  func.func @_pooler_classifier_kernel(%arg0: i32, %arg1: memref<8x32xf32, #tpu.memory_space<vmem>>, %arg2: memref<32x32xbf16, #tpu.memory_space<vmem>>, %arg3: memref<1x32xf32, #tpu.memory_space<vmem>>, %arg4: memref<32x128xbf16, #tpu.memory_space<vmem>>, %arg5: memref<1x128xf32, #tpu.memory_space<vmem>>, %arg6: memref<8x128xf32, #tpu.memory_space<vmem>>) attributes {dimension_semantics = [#tpu.dimension_semantics<parallel>], iteration_bounds = array<i64: 1>, scalar_prefetch = 0 : i64, scratch_operands = 0 : i64, tpu.core_type = #tpu.core_type<tc>, window_params = [{transform_indices = @transform_0, window_bounds = array<i64: 8, 32>}, {pipeline_mode = #tpu.pipeline_mode<synchronous>, transform_indices = @transform_1, window_bounds = array<i64: 32, 32>}, {pipeline_mode = #tpu.pipeline_mode<synchronous>, transform_indices = @transform_2, window_bounds = array<i64: 1, 32>}, {pipeline_mode = #tpu.pipeline_mode<synchronous>, transform_indices = @transform_3, window_bounds = array<i64: 32, 128>}, {pipeline_mode = #tpu.pipeline_mode<synchronous>, transform_indices = @transform_4, window_bounds = array<i64: 1, 128>}, {transform_indices = @transform_5, window_bounds = array<i64: 8, 128>}]} {
    %c0 = arith.constant 0 : index
    %c0_0 = arith.constant 0 : index
    %0 = vector.load %arg1[%c0, %c0_0] : memref<8x32xf32, #tpu.memory_space<vmem>>, vector<8x32xf32>
    %1 = arith.truncf %0 : vector<8x32xf32> to vector<8x32xbf16>
    %c0_1 = arith.constant 0 : index
    %c0_2 = arith.constant 0 : index
    %2 = vector.load %arg2[%c0_1, %c0_2] : memref<32x32xbf16, #tpu.memory_space<vmem>>, vector<32x32xbf16>
    %cst = arith.constant dense<0.000000e+00> : vector<8x32xf32>
    %3 = tpu.matmul %1, %2, %cst {dimension_numbers = #tpu.dot_dimension_numbers<[1], [0], [0], [1], [0, 0, 1, 1], [], []>} : vector<8x32xbf16>, vector<32x32xbf16>, vector<8x32xf32> -> vector<8x32xf32>
    %c0_3 = arith.constant 0 : index
    %c0_4 = arith.constant 0 : index
    %4 = vector.load %arg3[%c0_3, %c0_4] : memref<1x32xf32, #tpu.memory_space<vmem>>, vector<1x32xf32>
    %5 = vector.broadcast %4 : vector<1x32xf32> to vector<8x32xf32>
    %6 = arith.addf %3, %5 : vector<8x32xf32>
    %7 = math.tanh %6 : vector<8x32xf32>
    %8 = arith.truncf %7 : vector<8x32xf32> to vector<8x32xbf16>
    %c0_5 = arith.constant 0 : index
    %c0_6 = arith.constant 0 : index
    %9 = vector.load %arg4[%c0_5, %c0_6] : memref<32x128xbf16, #tpu.memory_space<vmem>>, vector<32x128xbf16>
    %cst_7 = arith.constant dense<0.000000e+00> : vector<8x128xf32>
    %10 = tpu.matmul %8, %9, %cst_7 {dimension_numbers = #tpu.dot_dimension_numbers<[1], [0], [0], [1], [0, 0, 1, 1], [], []>} : vector<8x32xbf16>, vector<32x128xbf16>, vector<8x128xf32> -> vector<8x128xf32>
    %c0_8 = arith.constant 0 : index
    %c0_9 = arith.constant 0 : index
    %11 = vector.load %arg5[%c0_8, %c0_9] : memref<1x128xf32, #tpu.memory_space<vmem>>, vector<1x128xf32>
    %12 = vector.broadcast %11 : vector<1x128xf32> to vector<8x128xf32>
    %13 = arith.addf %10, %12 : vector<8x128xf32>
    %c0_10 = arith.constant 0 : index
    %c0_11 = arith.constant 0 : index
    %14 = vector.load %arg6[%c0_10, %c0_11] : memref<8x128xf32, #tpu.memory_space<vmem>>, vector<8x128xf32>
    tpu.vector_store %arg6[%c0_10, %c0_11], %13 {strides = array<i32>} : memref<8x128xf32, #tpu.memory_space<vmem>>, vector<8x128xf32>,
    return
  }
  func.func @transform_0(%arg0: i32) -> (i32, i32) {
    %c0_i32 = arith.constant 0 : i32
    %c0_i32_0 = arith.constant 0 : i32
    return %arg0, %c0_i32 : i32, i32
  }
  func.func @transform_1(%arg0: i32) -> (i32, i32) {
    %c0_i32 = arith.constant 0 : i32
    %c0_i32_0 = arith.constant 0 : i32
    %c0_i32_1 = arith.constant 0 : i32
    return %c0_i32, %c0_i32_0 : i32, i32
  }
  func.func @transform_2(%arg0: i32) -> (i32, i32) {
    %c0_i32 = arith.constant 0 : i32
    %c0_i32_0 = arith.constant 0 : i32
    %c0_i32_1 = arith.constant 0 : i32
    return %c0_i32, %c0_i32_0 : i32, i32
  }
  func.func @transform_3(%arg0: i32) -> (i32, i32) {
    %c0_i32 = arith.constant 0 : i32
    %c0_i32_0 = arith.constant 0 : i32
    %c0_i32_1 = arith.constant 0 : i32
    return %c0_i32, %c0_i32_0 : i32, i32
  }
  func.func @transform_4(%arg0: i32) -> (i32, i32) {
    %c0_i32 = arith.constant 0 : i32
    %c0_i32_0 = arith.constant 0 : i32
    %c0_i32_1 = arith.constant 0 : i32
    return %c0_i32, %c0_i32_0 : i32, i32
  }
  func.func @transform_5(%arg0: i32) -> (i32, i32) {
    %c0_i32 = arith.constant 0 : i32
    %c0_i32_0 = arith.constant 0 : i32
    return %arg0, %c0_i32 : i32, i32
  }
}

</mosaic_0001>

<llo_original>
// kernel: tpu_custom_call.1
$region0: #{tpu_custom_call.1}
  #allocation0 [shape = 'u32[]', space=smem, size = 0x4, offset = 0x4, fixed_abs, tag = 'smem constant byte address 0x4 - core index']
  #allocation1 [shape = 'u32[144,128]{1,0:T(1,128)}', space=vmem, size = 0x12000, scoped, tag = 'internal scratch']
  %s0 = inlined_call_operand.hbm [shape: f32[8,32], index: 0, kind: input, shape index: {}]
  %s1 = inlined_call_operand.hbm [shape: bf16[32,32], index: 1, kind: input, shape index: {}]
  %s2 = inlined_call_operand.vmem [shape: f32[1,32], index: 2, kind: input, shape index: {}]
  %s3 = inlined_call_operand.hbm [shape: bf16[32,128], index: 3, kind: input, shape index: {}]
  %s4 = inlined_call_operand.vmem [shape: f32[1,128], index: 4, kind: input, shape index: {}]
  %s5 = inlined_call_operand.hbm [shape: f32[8,128], index: 5, kind: output, shape index: {}]
  %s6 = sld [smem:[#allocation0]]
  $region42: #{tpu_custom_call.1} parent=0
    _
  %s8 = ssub.s32 1, %s6
  %s9 = scalar_select 0, %s8, %s6
  $region1: #{tpu_custom_call.1} parent=0
    #allocation2 [shape = 'u8[4096]{0}', space=vmem, size = 0x1000, scoped, tag = 'input window, operand 0, single buffered']
    #allocation3 [shape = 's32[1]{0}', space=sflag, size = 0x4, scoped, tag = 'scoped memory for tpu_custom_call.1']
    #allocation4 [shape = 's32[1]{0}', space=sflag, size = 0x4, scoped, tag = 'scoped memory for tpu_custom_call.1']
    #allocation5 [shape = 'u8[8192]{0}', space=vmem, size = 0x2000, scoped, tag = 'input window, operand 1, single buffered']
    #allocation6 [shape = 's32[1]{0}', space=sflag, size = 0x4, scoped, tag = 'scoped memory for tpu_custom_call.1']
    #allocation7 [shape = 'u8[8192]{0}', space=vmem, size = 0x2000, scoped, tag = 'input window, operand 3, single buffered']
    #allocation8 [shape = 'u8[4096]{0}', space=vmem, size = 0x1000, scoped, tag = 'output window, operand 0, single buffered']
    %10 = vsyncpa [#allocation3], 0
    %11 = vsyncpa [#allocation6], 0
    %12 = vsyncpa [#allocation4], 0
    // Predicated region
    $region2: #{tpu_custom_call.1} parent=1 // pred_check
      _
    $region3: #{tpu_custom_call.1} parent=1 // pred_check_branch
      %14 = sbr.rel (0) target = $region5
    $region4: #{tpu_custom_call.1} parent=1 // pred_region
      %s16 = ssub.s32 128, 128
      %17 = vsyncadd [#allocation3], %s16
      %s19 = sshll.u32 [#allocation2], 4
      %s20 = int_to_ptr.vmem [resolvable:$true] %s19
      %22 = dma.hbm_to_vmem [thread:$0]  %s0, 128, %s20, [#allocation3]
    $region5: #{tpu_custom_call.1} parent=1 // pred_fallthru
      _
    // Predicated region
    $region6: #{tpu_custom_call.1} parent=1 // pred_check
      _
    $region7: #{tpu_custom_call.1} parent=1 // pred_check_branch
      %24 = sbr.rel (0) target = $region9
    $region8: #{tpu_custom_call.1} parent=1 // pred_region
      %s26 = ssub.s32 256, 256
      %27 = vsyncadd [#allocation6], %s26
      %s28 = sshll.u32 [#allocation5], 4
      %s29 = int_to_ptr.vmem [resolvable:$true] %s28
      %34 = dma.hbm_to_vmem [thread:$0]  %s1, 256, %s29, [#allocation6], 64, 64, 4
    $region9: #{tpu_custom_call.1} parent=1 // pred_fallthru
      _
    // Predicated region
    $region10: #{tpu_custom_call.1} parent=1 // pred_check
      _
    $region11: #{tpu_custom_call.1} parent=1 // pred_check_branch
      %36 = sbr.rel (0) target = $region13
    $region12: #{tpu_custom_call.1} parent=1 // pred_region
      _
    $region13: #{tpu_custom_call.1} parent=1 // pred_fallthru
      _
    // Predicated region
    $region14: #{tpu_custom_call.1} parent=1 // pred_check
      _
    $region15: #{tpu_custom_call.1} parent=1 // pred_check_branch
      %38 = sbr.rel (0) target = $region17
    $region16: #{tpu_custom_call.1} parent=1 // pred_region
      %s40 = ssub.s32 256, 256
      %41 = vsyncadd [#allocation6], %s40
      %s42 = sshll.u32 [#allocation7], 4
      %s43 = int_to_ptr.vmem [resolvable:$true] %s42
      %48 = dma.hbm_to_vmem [thread:$0]  %s3, 256, %s43, [#allocation6], 64, 64, 4
    $region17: #{tpu_custom_call.1} parent=1 // pred_fallthru
      _
    // Predicated region
    $region18: #{tpu_custom_call.1} parent=1 // pred_check
      _
    $region19: #{tpu_custom_call.1} parent=1 // pred_check_branch
      %50 = sbr.rel (0) target = $region21
    $region20: #{tpu_custom_call.1} parent=1 // pred_region
      _
    $region21: #{tpu_custom_call.1} parent=1 // pred_fallthru
      _
    // Predicated region
    $region22: #{tpu_custom_call.1} parent=1 // pred_check
      _
    $region23: #{tpu_custom_call.1} parent=1 // pred_check_branch
      %52 = sbr.rel (0) target = $region25
    $region24: #{tpu_custom_call.1} parent=1 // pred_region
      %53 = dma.done [#allocation3], 128
    $region25: #{tpu_custom_call.1} parent=1 // pred_fallthru
      _
    // Predicated region
    $region26: #{tpu_custom_call.1} parent=1 // pred_check
      _
    $region27: #{tpu_custom_call.1} parent=1 // pred_check_branch
      %55 = sbr.rel (0) target = $region29
    $region28: #{tpu_custom_call.1} parent=1 // pred_region
      %56 = dma.done [#allocation6], 256
    $region29: #{tpu_custom_call.1} parent=1 // pred_fallthru
      _
    // Predicated region
    $region30: #{tpu_custom_call.1} parent=1 // pred_check
      _
    $region31: #{tpu_custom_call.1} parent=1 // pred_check_branch
      %58 = sbr.rel (0) target = $region33
    $region32: #{tpu_custom_call.1} parent=1 // pred_region
      %59 = dma.done [#allocation6], 256
    $region33: #{tpu_custom_call.1} parent=1 // pred_fallthru
      _
    %v61 = vld [vmem:[#allocation2] sm:$0xff]
    %v62 = vpack.c.bf16 %v61, %v61
    %v63 = vld [vmem:[#allocation5] sm:$0xf]
    %v64 = vld [vmem:[#allocation5 + $0x4] sm:$0xf]
    %v65 = vld [vmem:[#allocation5 + $0x8] sm:$0xf]
    %v66 = vld [vmem:[#allocation5 + $0xc] sm:$0xf]
    %v67 = vld [vmem:[%s2] sm:$0x1]
    %v69 = vlaneseq
    %v70 = vshrl.u32 %v69, 7
    %v71 = vsub.s32 0, %v70
    %v72 = vrot.slane %v67, %v71
    %v78 = vunpack.c.l.b16 %v63
    %v79 = vunpack.c.l.b16 %v64
    %v80 = vunpack.c.l.b16 %v65
    %v81 = vunpack.c.l.b16 %v66
    %v82 = vpack.c.b16 %v79, %v78
    %v83 = vpack.c.b16 %v81, %v80
    %vm86 = vcmask 261120
    %v88 = vsel %vm86, %v62, 0
    %90 = vmatprep.subr.bf16.mxu0 0
    %91 = vmatpush1.bf16.msra.mxu0 0
    %92 = vmatprep.subr.bf16.mxu0 0
    %93 = vmatpush1.bf16.msra.mxu0 0
    %94 = vmatprep.subr.bf16.mxu0 0
    %95 = vmatpush1.bf16.msra.mxu0 0
    %96 = vmatprep.subr.bf16.mxu0 0
    %97 = vmatpush1.bf16.msra.mxu0 0
    %98 = vmatprep.subr.bf16.mxu0 0
    %99 = vmatpush1.bf16.msra.mxu0 0
    %100 = vmatprep.subr.bf16.mxu0 0
    %101 = vmatpush1.bf16.msra.mxu0 0
    %102 = vmatprep.subr.bf16.mxu0 0
    %103 = vmatpush1.bf16.msra.mxu0 %v83
    %104 = vmatprep.subr.bf16.mxu0 0
    %105 = vmatpush1.bf16.msra.mxu0 %v82
    %106 = vmatprep.subr.bf16.mxu0 0
    %107 = vmatpush2.bf16.msra.mxu0 0
    %108 = vmatprep.subr.bf16.mxu0 0
    %109 = vmatpush2.bf16.msra.mxu0 0
    %110 = vmatprep.subr.bf16.mxu0 0
    %111 = vmatpush2.bf16.msra.mxu0 0
    %112 = vmatprep.subr.bf16.mxu0 0
    %113 = vmatpush2.bf16.msra.mxu0 0
    %114 = vmatprep.subr.bf16.mxu0 0
    %115 = vmatpush2.bf16.msra.mxu0 0
    %116 = vmatprep.subr.bf16.mxu0 0
    %117 = vmatpush2.bf16.msra.mxu0 0
    %118 = vmatprep.subr.bf16.mxu0 0
    %119 = vmatpush2.bf16.msra.mxu0 0
    %120 = vmatprep.subr.bf16.mxu0 0
    %121 = vmatpush2.bf16.msra.mxu0 0
    %122 = vmatprep.mubr.bf16.mxu0 0
    %123 = vmatmul.mubr.bf16.gmra.mxu0 %v88
    %v124 = vpop.f32.mrf.mxu0
    %v125 = vadd.f32 %v72, %v124
    %v126 = vpop.f32.mrf.mxu0
    %v127 = vpop.f32.mrf.mxu0
    %v128 = vpop.f32.mrf.mxu0
    %129 = vdwg.mxu0
    %v130 = vtanh.pop %v125
    %v131 = vpack.c.bf16 %v130, %v130
    %v132 = vld [vmem:[#allocation7] sm:$0xf]
    %v133 = vld [vmem:[#allocation7 + $0x4] sm:$0xf]
    %v134 = vld [vmem:[#allocation7 + $0x8] sm:$0xf]
    %v135 = vld [vmem:[#allocation7 + $0xc] sm:$0xf]
    %v136 = vld [vmem:[%s4] sm:$0x1]
    %v138 = vlaneseq
    %v139 = vshrl.u32 %v138, 7
    %v140 = vsub.s32 0, %v139
    %v141 = vrot.slane %v136, %v140
    %v147 = vunpack.c.l.b16 %v132
    %v148 = vunpack.c.l.b16 %v133
    %v149 = vunpack.c.l.b16 %v134
    %v150 = vunpack.c.l.b16 %v135
    %v151 = vpack.c.b16 %v148, %v147
    %v152 = vpack.c.b16 %v150, %v149
    %v156 = vsel %vm86, %v131, 0
    %158 = vmatprep.subr.bf16.mxu0 0
    %159 = vmatpush1.bf16.msra.mxu0 0
    %160 = vmatprep.subr.bf16.mxu0 0
    %161 = vmatpush1.bf16.msra.mxu0 0
    %162 = vmatprep.subr.bf16.mxu0 0
    %163 = vmatpush1.bf16.msra.mxu0 0
    %164 = vmatprep.subr.bf16.mxu0 0
    %165 = vmatpush1.bf16.msra.mxu0 0
    %166 = vmatprep.subr.bf16.mxu0 0
    %167 = vmatpush1.bf16.msra.mxu0 0
    %168 = vmatprep.subr.bf16.mxu0 0
    %169 = vmatpush1.bf16.msra.mxu0 0
    %170 = vmatprep.subr.bf16.mxu0 0
    %171 = vmatpush1.bf16.msra.mxu0 %v152
    %172 = vmatprep.subr.bf16.mxu0 0
    %173 = vmatpush1.bf16.msra.mxu0 %v151
    %174 = vmatprep.subr.bf16.mxu0 0
    %175 = vmatpush2.bf16.msra.mxu0 0
    %176 = vmatprep.subr.bf16.mxu0 0
    %177 = vmatpush2.bf16.msra.mxu0 0
    %178 = vmatprep.subr.bf16.mxu0 0
    %179 = vmatpush2.bf16.msra.mxu0 0
    %180 = vmatprep.subr.bf16.mxu0 0
    %181 = vmatpush2.bf16.msra.mxu0 0
    %182 = vmatprep.subr.bf16.mxu0 0
    %183 = vmatpush2.bf16.msra.mxu0 0
    %184 = vmatprep.subr.bf16.mxu0 0
    %185 = vmatpush2.bf16.msra.mxu0 0
    %186 = vmatprep.subr.bf16.mxu0 0
    %187 = vmatpush2.bf16.msra.mxu0 0
    %188 = vmatprep.subr.bf16.mxu0 0
    %189 = vmatpush2.bf16.msra.mxu0 0
    %190 = vmatprep.mubr.bf16.mxu0 0
    %191 = vmatmul.mubr.bf16.gmra.mxu0 %v156
    %v192 = vpop.f32.mrf.mxu0
    %v193 = vadd.f32 %v141, %v192
    %v194 = vpop.f32.mrf.mxu0
    %v195 = vpop.f32.mrf.mxu0
    %v196 = vpop.f32.mrf.mxu0
    %197 = vdwg.mxu0
    %198 = vst [vmem:[#allocation8] sm:$0xff] %v193
    // Predicated region
    $region34: #{tpu_custom_call.1} parent=1 // pred_check
      _
    $region35: #{tpu_custom_call.1} parent=1 // pred_check_branch
      %200 = sbr.rel (0) target = $region37
    $region36: #{tpu_custom_call.1} parent=1 // pred_region
      %s202 = ssub.s32 128, 128
      %203 = vsyncadd [#allocation4], %s202
      %s205 = sshll.u32 [#allocation8], 4
      %s206 = int_to_ptr.vmem [resolvable:$true] %s205
      %208 = dma.vmem_to_hbm [thread:$0]  %s206, 128, %s5, [#allocation4]
    $region37: #{tpu_custom_call.1} parent=1 // pred_fallthru
      _
    // Predicated region
    $region38: #{tpu_custom_call.1} parent=1 // pred_check
      _
    $region39: #{tpu_custom_call.1} parent=1 // pred_check_branch
      %210 = sbr.rel (0) target = $region41
    $region40: #{tpu_custom_call.1} parent=1 // pred_region
      %211 = dma.done [#allocation4], 128
    $region41: #{tpu_custom_call.1} parent=1 // pred_fallthru
      _
    %212 = vsyncpa [#allocation3], 1
    %213 = vsyncpa [#allocation6], 1
    %214 = vsyncpa [#allocation4], 1

</llo_original>
